<compile_context>
chip_gen: v5e
topology: v5e:2x2
jax: 0.10.0
libtpu: 0.0.40
codegen_flags: <defaults>
</compile_context>

<pallas_src>
import jax
import jax.numpy as jnp
from jax.experimental import pallas as pl
from jax.experimental.pallas import tpu as pltpu


def _lstm_regressor_kernel(x_ref, w_ih_ref, w_hh_ref, b_ref,
                           w_lin_ref, b_lin_ref, out_ref, xproj_ref):
    # x_ref:     (T*Bp, I)    time-major, batch-padded, flattened input
    # w_ih_ref:  (I, 4*Hp)    fused input->hidden weights, gate order i,f,o,g
    # w_hh_ref:  (Hp, 4*Hp)   fused hidden->hidden weights, gate order i,f,o,g
    # b_ref:     (1, 4*Hp)    combined bias (b_ih + b_hh), zero in padded lanes
    # w_lin_ref: (1, Hp)      final linear weight row (zero-padded)
    # b_lin_ref: (1, 1)       final linear bias
    # out_ref:   (Bp, 1)      regression output (padded rows dropped by wrapper)
    # xproj_ref: (T*Bp, 4*Hp) VMEM scratch for the hoisted input projection
    TB = x_ref.shape[0]
    Hp = w_hh_ref.shape[0]
    Bp = out_ref.shape[0]
    T = TB // Bp
    H3 = 3 * Hp

    # (1) Hoisted, data-independent input projection (+ bias) for ALL steps:
    #     one large MXU matmul instead of small ones inside the recurrence.
    xproj_ref[...] = (jnp.dot(x_ref[...], w_ih_ref[...],
                              preferred_element_type=jnp.float32)
                      + b_ref[...])

    # (2) Loop-invariant recurrent weight loaded once ((64,256) f32 = 16 vregs).
    w_hh = w_hh_ref[...]

    h0 = jnp.zeros((Bp, Hp), jnp.float32)
    c0 = jnp.zeros((Bp, Hp), jnp.float32)

    def step(t, carry):
        h, c = carry
        row = pl.multiple_of(t * Bp, Bp)
        # Single fused (Bp,Hp)x(Hp,4Hp) matmul per step + precomputed x part.
        pre = (xproj_ref[pl.ds(row, Bp), :]
               + jnp.dot(h, w_hh, preferred_element_type=jnp.float32))
        # Kernel gate order: i, f, o | g.
        # sigmoid(x) = 0.5*tanh(0.5*x)+0.5  -> exactly one EUP pass per region;
        # i,f,o are contiguous, so one fused activation over (Bp, 3*Hp).
        sig = 0.5 * jnp.tanh(0.5 * pre[:, :H3]) + 0.5
        g_g = jnp.tanh(pre[:, H3:])
        i_g = sig[:, 0 * Hp:1 * Hp]
        f_g = sig[:, 1 * Hp:2 * Hp]
        o_g = sig[:, 2 * Hp:3 * Hp]
        c_new = f_g * c + i_g * g_g
        h_new = o_g * jnp.tanh(c_new)
        return (h_new, c_new)

    # (3) Fully unrolled short recurrence (T is static) for cross-step overlap.
    h_last, _ = jax.lax.fori_loop(0, T, step, (h0, c0), unroll=True)

    # (4) Final Linear(H,1) as VPU multiply + lane reduction; padded hidden
    #     lanes are exactly zero so they do not contribute.
    out_ref[...] = (jnp.sum(h_last * w_lin_ref[...], axis=-1, keepdims=True)
                    + b_lin_ref[...])


def lstm_regressor(x, w_ih, w_hh, b_ih, b_hh, w_lin, b_lin):
    """x: (B, T, I) float32 (batch_first). Returns (B, 1) float32."""
    B, T, I = x.shape
    H = w_hh.shape[1]                      # w_hh: (4H, H)

    # Padded sizes: hidden to a multiple of 64 (clean gate-slice boundaries),
    # batch to a sublane multiple (8). Padded lanes/rows stay mathematically
    # zero through the recurrence (zero weights + zero bias => h_pad == 0).
    Hp = ((H + 63) // 64) * 64
    Bp = ((B + 7) // 8) * 8

    # PyTorch gate row-order is (i, f, g, o); the kernel wants (i, f, o, g) so
    # the three sigmoid gates form one contiguous lane region.
    perm = jnp.array([0, 1, 3, 2], dtype=jnp.int32)

    # --- layout glue (plain JAX, outside the kernel) -----------------------
    x_tm = jnp.transpose(x, (1, 0, 2)).astype(jnp.float32)          # (T, B, I)
    x_tm = jnp.pad(x_tm, ((0, 0), (0, Bp - B), (0, 0)))             # (T, Bp, I)
    x_flat = x_tm.reshape(T * Bp, I)                                # (T*Bp, I)

    # Fused per-gate weights -> (in, 4*Hp) with gate g in columns
    # [g*Hp, (g+1)*Hp), zero-padded beyond H.
    w_ih_g = w_ih.reshape(4, H, I)[perm]                            # (4, H, I)
    w_ih_g = jnp.transpose(w_ih_g, (0, 2, 1)).astype(jnp.float32)   # (4, I, H)
    w_ih_g = jnp.pad(w_ih_g, ((0, 0), (0, 0), (0, Hp - H)))         # (4, I, Hp)
    w_ih_fused = jnp.transpose(w_ih_g, (1, 0, 2)).reshape(I, 4 * Hp)

    w_hh_g = w_hh.reshape(4, H, H)[perm]                            # (4, out, in)
    w_hh_g = jnp.transpose(w_hh_g, (0, 2, 1)).astype(jnp.float32)   # (4, in, out)
    w_hh_g = jnp.pad(w_hh_g, ((0, 0), (0, Hp - H), (0, Hp - H)))    # (4, Hp, Hp)
    w_hh_fused = jnp.transpose(w_hh_g, (1, 0, 2)).reshape(Hp, 4 * Hp)

    b_g = (b_ih + b_hh).reshape(4, H)[perm].astype(jnp.float32)     # (4, H)
    b_g = jnp.pad(b_g, ((0, 0), (0, Hp - H))).reshape(1, 4 * Hp)    # (1, 4Hp)

    w_lin_p = jnp.pad(w_lin.astype(jnp.float32), ((0, 0), (0, Hp - H)))  # (1, Hp)
    b_lin_r = b_lin.reshape(1, 1).astype(jnp.float32)                    # (1, 1)

    vmem = pl.BlockSpec(memory_space=pltpu.MemorySpace.VMEM)
    out_p = pl.pallas_call(
        _lstm_regressor_kernel,
        out_shape=jax.ShapeDtypeStruct((Bp, 1), jnp.float32),
        in_specs=[vmem] * 6,
        out_specs=vmem,
        scratch_shapes=[pltpu.VMEM((T * Bp, 4 * Hp), jnp.float32)],
    )(x_flat, w_ih_fused, w_hh_fused, b_g, w_lin_p, b_lin_r)
    return out_p[:B]


def _reference(x, w_ih, w_hh, b_ih, b_hh, w_lin, b_lin):
    """Pure-JAX reference matching torch.nn.LSTM + Linear semantics."""
    B, T, I = x.shape
    H = w_hh.shape[1]
    h = jnp.zeros((B, H), jnp.float32)
    c = jnp.zeros((B, H), jnp.float32)
    for t in range(T):
        gates = x[:, t, :] @ w_ih.T + h @ w_hh.T + b_ih + b_hh  # (B, 4H)
        i_g = jax.nn.sigmoid(gates[:, 0 * H:1 * H])
        f_g = jax.nn.sigmoid(gates[:, 1 * H:2 * H])
        g_g = jnp.tanh(gates[:, 2 * H:3 * H])
        o_g = jax.nn.sigmoid(gates[:, 3 * H:4 * H])
        c = f_g * c + i_g * g_g
        h = o_g * jnp.tanh(c)
    return h @ w_lin.T + b_lin


if __name__ == "__main__":
    B, T, I, H = 2, 8, 15, 50

    key = jax.random.PRNGKey(0)
    ks = jax.random.split(key, 7)
    bound = 1.0 / jnp.sqrt(jnp.float32(H))  # PyTorch default uniform bound

    x = jax.random.normal(ks[0], (B, T, I), dtype=jnp.float32)
    w_ih = jax.random.uniform(ks[1], (4 * H, I), jnp.float32, -bound, bound)
    w_hh = jax.random.uniform(ks[2], (4 * H, H), jnp.float32, -bound, bound)
    b_ih = jax.random.uniform(ks[3], (4 * H,), jnp.float32, -bound, bound)
    b_hh = jax.random.uniform(ks[4], (4 * H,), jnp.float32, -bound, bound)
    w_lin = jax.random.uniform(ks[5], (1, H), jnp.float32, -bound, bound)
    b_lin = jax.random.uniform(ks[6], (1,), jnp.float32, -bound, bound)

    out = lstm_regressor(x, w_ih, w_hh, b_ih, b_hh, w_lin, b_lin)
    out = jax.block_until_ready(out)

    ref = _reference(x, w_ih, w_hh, b_ih, b_hh, w_lin, b_lin)
    assert out.shape == (B, 1), out.shape
    assert jnp.allclose(out, ref, atol=1e-5, rtol=1e-5), (out, ref)

    print("KERNEL_OK")
</pallas_src>

<mosaic_0001>
module attributes {stable_mosaic.version = 11 : i64} {
  func.func @_lstm_regressor_kernel(%arg0: memref<64x15xf32, #tpu.memory_space<vmem>>, %arg1: memref<15x256xf32, #tpu.memory_space<vmem>>, %arg2: memref<64x256xf32, #tpu.memory_space<vmem>>, %arg3: memref<1x256xf32, #tpu.memory_space<vmem>>, %arg4: memref<1x64xf32, #tpu.memory_space<vmem>>, %arg5: memref<1x1xf32, #tpu.memory_space<vmem>>, %arg6: memref<8x1xf32, #tpu.memory_space<vmem>>, %arg7: memref<64x256xf32, #tpu.memory_space<vmem>>) attributes {dimension_semantics = [], scalar_prefetch = 0 : i64, scratch_operands = 1 : i64, tpu.core_type = #tpu.core_type<tc>} {
    %c0 = arith.constant 0 : index
    %c0_0 = arith.constant 0 : index
    %0 = vector.load %arg0[%c0, %c0_0] : memref<64x15xf32, #tpu.memory_space<vmem>>, vector<64x15xf32>
    %c0_1 = arith.constant 0 : index
    %c0_2 = arith.constant 0 : index
    %1 = vector.load %arg1[%c0_1, %c0_2] : memref<15x256xf32, #tpu.memory_space<vmem>>, vector<15x256xf32>
    %cst = arith.constant dense<0.000000e+00> : vector<64x256xf32>
    %2 = tpu.matmul %0, %1, %cst {dimension_numbers = #tpu.dot_dimension_numbers<[1], [0], [0], [1], [0, 0, 1, 1], [], []>} : vector<64x15xf32>, vector<15x256xf32>, vector<64x256xf32> -> vector<64x256xf32>
    %c0_3 = arith.constant 0 : index
    %c0_4 = arith.constant 0 : index
    %3 = vector.load %arg3[%c0_3, %c0_4] : memref<1x256xf32, #tpu.memory_space<vmem>>, vector<1x256xf32>
    %4 = vector.broadcast %3 : vector<1x256xf32> to vector<64x256xf32>
    %5 = arith.addf %2, %4 : vector<64x256xf32>
    %c0_5 = arith.constant 0 : index
    %c0_6 = arith.constant 0 : index
    %6 = vector.load %arg7[%c0_5, %c0_6] : memref<64x256xf32, #tpu.memory_space<vmem>>, vector<64x256xf32>
    tpu.vector_store %arg7[%c0_5, %c0_6], %5 {strides = array<i32>} : memref<64x256xf32, #tpu.memory_space<vmem>>, vector<64x256xf32>,
    %c0_7 = arith.constant 0 : index
    %c0_8 = arith.constant 0 : index
    %7 = vector.load %arg2[%c0_7, %c0_8] : memref<64x256xf32, #tpu.memory_space<vmem>>, vector<64x256xf32>
    %cst_9 = arith.constant 0.000000e+00 : f32
    %8 = vector.broadcast %cst_9 : f32 to vector<8x64xf32>
    %cst_10 = arith.constant 0.000000e+00 : f32
    %9 = vector.broadcast %cst_10 : f32 to vector<8x64xf32>
    %c0_i32 = arith.constant 0 : i32
    %c8_i32 = arith.constant 8 : i32
    %10 = arith.muli %c0_i32, %c8_i32 : i32
    %11 = tpu.assume_multiple %10, 8 : i32
    %12 = arith.index_cast %11 : i32 to index
    %c0_11 = arith.constant 0 : index
    %13 = vector.load %arg7[%12, %c0_11] : memref<64x256xf32, #tpu.memory_space<vmem>>, vector<8x256xf32>
    %cst_12 = arith.constant dense<0.000000e+00> : vector<8x256xf32>
    %14 = tpu.matmul %8, %7, %cst_12 {dimension_numbers = #tpu.dot_dimension_numbers<[1], [0], [0], [1], [0, 0, 1, 1], [], []>} : vector<8x64xf32>, vector<64x256xf32>, vector<8x256xf32> -> vector<8x256xf32>
    %15 = arith.addf %13, %14 : vector<8x256xf32>
    %16 = vector.extract_strided_slice %15 {offsets = [0, 0], sizes = [8, 192], strides = [1, 1]} : vector<8x256xf32> to vector<8x192xf32>
    %cst_13 = arith.constant 5.000000e-01 : f32
    %17 = vector.broadcast %cst_13 : f32 to vector<8x192xf32>
    %18 = arith.mulf %17, %16 : vector<8x192xf32>
    %19 = math.tanh %18 : vector<8x192xf32>
    %cst_14 = arith.constant 5.000000e-01 : f32
    %20 = vector.broadcast %cst_14 : f32 to vector<8x192xf32>
    %21 = arith.mulf %20, %19 : vector<8x192xf32>
    %cst_15 = arith.constant 5.000000e-01 : f32
    %22 = vector.broadcast %cst_15 : f32 to vector<8x192xf32>
    %23 = arith.addf %21, %22 : vector<8x192xf32>
    %24 = vector.extract_strided_slice %15 {offsets = [0, 192], sizes = [8, 64], strides = [1, 1]} : vector<8x256xf32> to vector<8x64xf32>
    %25 = math.tanh %24 : vector<8x64xf32>
    %26 = vector.extract_strided_slice %23 {offsets = [0, 0], sizes = [8, 64], strides = [1, 1]} : vector<8x192xf32> to vector<8x64xf32>
    %27 = vector.extract_strided_slice %23 {offsets = [0, 64], sizes = [8, 64], strides = [1, 1]} : vector<8x192xf32> to vector<8x64xf32>
    %28 = vector.extract_strided_slice %23 {offsets = [0, 128], sizes = [8, 64], strides = [1, 1]} : vector<8x192xf32> to vector<8x64xf32>
    %29 = arith.mulf %27, %9 : vector<8x64xf32>
    %30 = arith.mulf %26, %25 : vector<8x64xf32>
    %31 = arith.addf %29, %30 : vector<8x64xf32>
    %32 = math.tanh %31 : vector<8x64xf32>
    %33 = arith.mulf %28, %32 : vector<8x64xf32>
    %c1_i32 = arith.constant 1 : i32
    %c8_i32_16 = arith.constant 8 : i32
    %34 = arith.muli %c1_i32, %c8_i32_16 : i32
    %35 = tpu.assume_multiple %34, 8 : i32
    %36 = arith.index_cast %35 : i32 to index
    %c0_17 = arith.constant 0 : index
    %37 = vector.load %arg7[%36, %c0_17] : memref<64x256xf32, #tpu.memory_space<vmem>>, vector<8x256xf32>
    %cst_18 = arith.constant dense<0.000000e+00> : vector<8x256xf32>
    %38 = tpu.matmul %33, %7, %cst_18 {dimension_numbers = #tpu.dot_dimension_numbers<[1], [0], [0], [1], [0, 0, 1, 1], [], []>} : vector<8x64xf32>, vector<64x256xf32>, vector<8x256xf32> -> vector<8x256xf32>
    %39 = arith.addf %37, %38 : vector<8x256xf32>
    %40 = vector.extract_strided_slice %39 {offsets = [0, 0], sizes = [8, 192], strides = [1, 1]} : vector<8x256xf32> to vector<8x192xf32>
    %cst_19 = arith.constant 5.000000e-01 : f32
    %41 = vector.broadcast %cst_19 : f32 to vector<8x192xf32>
    %42 = arith.mulf %41, %40 : vector<8x192xf32>
    %43 = math.tanh %42 : vector<8x192xf32>
    %cst_20 = arith.constant 5.000000e-01 : f32
    %44 = vector.broadcast %cst_20 : f32 to vector<8x192xf32>
    %45 = arith.mulf %44, %43 : vector<8x192xf32>
    %cst_21 = arith.constant 5.000000e-01 : f32
    %46 = vector.broadcast %cst_21 : f32 to vector<8x192xf32>
    %47 = arith.addf %45, %46 : vector<8x192xf32>
    %48 = vector.extract_strided_slice %39 {offsets = [0, 192], sizes = [8, 64], strides = [1, 1]} : vector<8x256xf32> to vector<8x64xf32>
    %49 = math.tanh %48 : vector<8x64xf32>
    %50 = vector.extract_strided_slice %47 {offsets = [0, 0], sizes = [8, 64], strides = [1, 1]} : vector<8x192xf32> to vector<8x64xf32>
    %51 = vector.extract_strided_slice %47 {offsets = [0, 64], sizes = [8, 64], strides = [1, 1]} : vector<8x192xf32> to vector<8x64xf32>
    %52 = vector.extract_strided_slice %47 {offsets = [0, 128], sizes = [8, 64], strides = [1, 1]} : vector<8x192xf32> to vector<8x64xf32>
    %53 = arith.mulf %51, %31 : vector<8x64xf32>
    %54 = arith.mulf %50, %49 : vector<8x64xf32>
    %55 = arith.addf %53, %54 : vector<8x64xf32>
    %56 = math.tanh %55 : vector<8x64xf32>
    %57 = arith.mulf %52, %56 : vector<8x64xf32>
    %c2_i32 = arith.constant 2 : i32
    %c8_i32_22 = arith.constant 8 : i32
    %58 = arith.muli %c2_i32, %c8_i32_22 : i32
    %59 = tpu.assume_multiple %58, 8 : i32
    %60 = arith.index_cast %59 : i32 to index
    %c0_23 = arith.constant 0 : index
    %61 = vector.load %arg7[%60, %c0_23] : memref<64x256xf32, #tpu.memory_space<vmem>>, vector<8x256xf32>
    %cst_24 = arith.constant dense<0.000000e+00> : vector<8x256xf32>
    %62 = tpu.matmul %57, %7, %cst_24 {dimension_numbers = #tpu.dot_dimension_numbers<[1], [0], [0], [1], [0, 0, 1, 1], [], []>} : vector<8x64xf32>, vector<64x256xf32>, vector<8x256xf32> -> vector<8x256xf32>
    %63 = arith.addf %61, %62 : vector<8x256xf32>
    %64 = vector.extract_strided_slice %63 {offsets = [0, 0], sizes = [8, 192], strides = [1, 1]} : vector<8x256xf32> to vector<8x192xf32>
    %cst_25 = arith.constant 5.000000e-01 : f32
    %65 = vector.broadcast %cst_25 : f32 to vector<8x192xf32>
    %66 = arith.mulf %65, %64 : vector<8x192xf32>
    %67 = math.tanh %66 : vector<8x192xf32>
    %cst_26 = arith.constant 5.000000e-01 : f32
    %68 = vector.broadcast %cst_26 : f32 to vector<8x192xf32>
    %69 = arith.mulf %68, %67 : vector<8x192xf32>
    %cst_27 = arith.constant 5.000000e-01 : f32
    %70 = vector.broadcast %cst_27 : f32 to vector<8x192xf32>
    %71 = arith.addf %69, %70 : vector<8x192xf32>
    %72 = vector.extract_strided_slice %63 {offsets = [0, 192], sizes = [8, 64], strides = [1, 1]} : vector<8x256xf32> to vector<8x64xf32>
    %73 = math.tanh %72 : vector<8x64xf32>
    %74 = vector.extract_strided_slice %71 {offsets = [0, 0], sizes = [8, 64], strides = [1, 1]} : vector<8x192xf32> to vector<8x64xf32>
    %75 = vector.extract_strided_slice %71 {offsets = [0, 64], sizes = [8, 64], strides = [1, 1]} : vector<8x192xf32> to vector<8x64xf32>
    %76 = vector.extract_strided_slice %71 {offsets = [0, 128], sizes = [8, 64], strides = [1, 1]} : vector<8x192xf32> to vector<8x64xf32>
    %77 = arith.mulf %75, %55 : vector<8x64xf32>
    %78 = arith.mulf %74, %73 : vector<8x64xf32>
    %79 = arith.addf %77, %78 : vector<8x64xf32>
    %80 = math.tanh %79 : vector<8x64xf32>
    %81 = arith.mulf %76, %80 : vector<8x64xf32>
    %c3_i32 = arith.constant 3 : i32
    %c8_i32_28 = arith.constant 8 : i32
    %82 = arith.muli %c3_i32, %c8_i32_28 : i32
    %83 = tpu.assume_multiple %82, 8 : i32
    %84 = arith.index_cast %83 : i32 to index
    %c0_29 = arith.constant 0 : index
    %85 = vector.load %arg7[%84, %c0_29] : memref<64x256xf32, #tpu.memory_space<vmem>>, vector<8x256xf32>
    %cst_30 = arith.constant dense<0.000000e+00> : vector<8x256xf32>
    %86 = tpu.matmul %81, %7, %cst_30 {dimension_numbers = #tpu.dot_dimension_numbers<[1], [0], [0], [1], [0, 0, 1, 1], [], []>} : vector<8x64xf32>, vector<64x256xf32>, vector<8x256xf32> -> vector<8x256xf32>
    %87 = arith.addf %85, %86 : vector<8x256xf32>
    %88 = vector.extract_strided_slice %87 {offsets = [0, 0], sizes = [8, 192], strides = [1, 1]} : vector<8x256xf32> to vector<8x192xf32>
    %cst_31 = arith.constant 5.000000e-01 : f32
    %89 = vector.broadcast %cst_31 : f32 to vector<8x192xf32>
    %90 = arith.mulf %89, %88 : vector<8x192xf32>
    %91 = math.tanh %90 : vector<8x192xf32>
    %cst_32 = arith.constant 5.000000e-01 : f32
    %92 = vector.broadcast %cst_32 : f32 to vector<8x192xf32>
    %93 = arith.mulf %92, %91 : vector<8x192xf32>
    %cst_33 = arith.constant 5.000000e-01 : f32
    %94 = vector.broadcast %cst_33 : f32 to vector<8x192xf32>
    %95 = arith.addf %93, %94 : vector<8x192xf32>
    %96 = vector.extract_strided_slice %87 {offsets = [0, 192], sizes = [8, 64], strides = [1, 1]} : vector<8x256xf32> to vector<8x64xf32>
    %97 = math.tanh %96 : vector<8x64xf32>
    %98 = vector.extract_strided_slice %95 {offsets = [0, 0], sizes = [8, 64], strides = [1, 1]} : vector<8x192xf32> to vector<8x64xf32>
    %99 = vector.extract_strided_slice %95 {offsets = [0, 64], sizes = [8, 64], strides = [1, 1]} : vector<8x192xf32> to vector<8x64xf32>
    %100 = vector.extract_strided_slice %95 {offsets = [0, 128], sizes = [8, 64], strides = [1, 1]} : vector<8x192xf32> to vector<8x64xf32>
    %101 = arith.mulf %99, %79 : vector<8x64xf32>
    %102 = arith.mulf %98, %97 : vector<8x64xf32>
    %103 = arith.addf %101, %102 : vector<8x64xf32>
    %104 = math.tanh %103 : vector<8x64xf32>
    %105 = arith.mulf %100, %104 : vector<8x64xf32>
    %c4_i32 = arith.constant 4 : i32
    %c8_i32_34 = arith.constant 8 : i32
    %106 = arith.muli %c4_i32, %c8_i32_34 : i32
    %107 = tpu.assume_multiple %106, 8 : i32
    %108 = arith.index_cast %107 : i32 to index
    %c0_35 = arith.constant 0 : index
    %109 = vector.load %arg7[%108, %c0_35] : memref<64x256xf32, #tpu.memory_space<vmem>>, vector<8x256xf32>
    %cst_36 = arith.constant dense<0.000000e+00> : vector<8x256xf32>
    %110 = tpu.matmul %105, %7, %cst_36 {dimension_numbers = #tpu.dot_dimension_numbers<[1], [0], [0], [1], [0, 0, 1, 1], [], []>} : vector<8x64xf32>, vector<64x256xf32>, vector<8x256xf32> -> vector<8x256xf32>
    %111 = arith.addf %109, %110 : vector<8x256xf32>
    %112 = vector.extract_strided_slice %111 {offsets = [0, 0], sizes = [8, 192], strides = [1, 1]} : vector<8x256xf32> to vector<8x192xf32>
    %cst_37 = arith.constant 5.000000e-01 : f32
    %113 = vector.broadcast %cst_37 : f32 to vector<8x192xf32>
    %114 = arith.mulf %113, %112 : vector<8x192xf32>
    %115 = math.tanh %114 : vector<8x192xf32>
    %cst_38 = arith.constant 5.000000e-01 : f32
    %116 = vector.broadcast %cst_38 : f32 to vector<8x192xf32>
    %117 = arith.mulf %116, %115 : vector<8x192xf32>
    %cst_39 = arith.constant 5.000000e-01 : f32
    %118 = vector.broadcast %cst_39 : f32 to vector<8x192xf32>
    %119 = arith.addf %117, %118 : vector<8x192xf32>
    %120 = vector.extract_strided_slice %111 {offsets = [0, 192], sizes = [8, 64], strides = [1, 1]} : vector<8x256xf32> to vector<8x64xf32>
    %121 = math.tanh %120 : vector<8x64xf32>
    %122 = vector.extract_strided_slice %119 {offsets = [0, 0], sizes = [8, 64], strides = [1, 1]} : vector<8x192xf32> to vector<8x64xf32>
    %123 = vector.extract_strided_slice %119 {offsets = [0, 64], sizes = [8, 64], strides = [1, 1]} : vector<8x192xf32> to vector<8x64xf32>
    %124 = vector.extract_strided_slice %119 {offsets = [0, 128], sizes = [8, 64], strides = [1, 1]} : vector<8x192xf32> to vector<8x64xf32>
    %125 = arith.mulf %123, %103 : vector<8x64xf32>
    %126 = arith.mulf %122, %121 : vector<8x64xf32>
    %127 = arith.addf %125, %126 : vector<8x64xf32>
    %128 = math.tanh %127 : vector<8x64xf32>
    %129 = arith.mulf %124, %128 : vector<8x64xf32>
    %c5_i32 = arith.constant 5 : i32
    %c8_i32_40 = arith.constant 8 : i32
    %130 = arith.muli %c5_i32, %c8_i32_40 : i32
    %131 = tpu.assume_multiple %130, 8 : i32
    %132 = arith.index_cast %131 : i32 to index
    %c0_41 = arith.constant 0 : index
    %133 = vector.load %arg7[%132, %c0_41] : memref<64x256xf32, #tpu.memory_space<vmem>>, vector<8x256xf32>
    %cst_42 = arith.constant dense<0.000000e+00> : vector<8x256xf32>
    %134 = tpu.matmul %129, %7, %cst_42 {dimension_numbers = #tpu.dot_dimension_numbers<[1], [0], [0], [1], [0, 0, 1, 1], [], []>} : vector<8x64xf32>, vector<64x256xf32>, vector<8x256xf32> -> vector<8x256xf32>
    %135 = arith.addf %133, %134 : vector<8x256xf32>
    %136 = vector.extract_strided_slice %135 {offsets = [0, 0], sizes = [8, 192], strides = [1, 1]} : vector<8x256xf32> to vector<8x192xf32>
    %cst_43 = arith.constant 5.000000e-01 : f32
    %137 = vector.broadcast %cst_43 : f32 to vector<8x192xf32>
    %138 = arith.mulf %137, %136 : vector<8x192xf32>
    %139 = math.tanh %138 : vector<8x192xf32>
    %cst_44 = arith.constant 5.000000e-01 : f32
    %140 = vector.broadcast %cst_44 : f32 to vector<8x192xf32>
    %141 = arith.mulf %140, %139 : vector<8x192xf32>
    %cst_45 = arith.constant 5.000000e-01 : f32
    %142 = vector.broadcast %cst_45 : f32 to vector<8x192xf32>
    %143 = arith.addf %141, %142 : vector<8x192xf32>
    %144 = vector.extract_strided_slice %135 {offsets = [0, 192], sizes = [8, 64], strides = [1, 1]} : vector<8x256xf32> to vector<8x64xf32>
    %145 = math.tanh %144 : vector<8x64xf32>
    %146 = vector.extract_strided_slice %143 {offsets = [0, 0], sizes = [8, 64], strides = [1, 1]} : vector<8x192xf32> to vector<8x64xf32>
    %147 = vector.extract_strided_slice %143 {offsets = [0, 64], sizes = [8, 64], strides = [1, 1]} : vector<8x192xf32> to vector<8x64xf32>
    %148 = vector.extract_strided_slice %143 {offsets = [0, 128], sizes = [8, 64], strides = [1, 1]} : vector<8x192xf32> to vector<8x64xf32>
    %149 = arith.mulf %147, %127 : vector<8x64xf32>
    %150 = arith.mulf %146, %145 : vector<8x64xf32>
    %151 = arith.addf %149, %150 : vector<8x64xf32>
    %152 = math.tanh %151 : vector<8x64xf32>
    %153 = arith.mulf %148, %152 : vector<8x64xf32>
    %c6_i32 = arith.constant 6 : i32
    %c8_i32_46 = arith.constant 8 : i32
    %154 = arith.muli %c6_i32, %c8_i32_46 : i32
    %155 = tpu.assume_multiple %154, 8 : i32
    %156 = arith.index_cast %155 : i32 to index
    %c0_47 = arith.constant 0 : index
    %157 = vector.load %arg7[%156, %c0_47] : memref<64x256xf32, #tpu.memory_space<vmem>>, vector<8x256xf32>
    %cst_48 = arith.constant dense<0.000000e+00> : vector<8x256xf32>
    %158 = tpu.matmul %153, %7, %cst_48 {dimension_numbers = #tpu.dot_dimension_numbers<[1], [0], [0], [1], [0, 0, 1, 1], [], []>} : vector<8x64xf32>, vector<64x256xf32>, vector<8x256xf32> -> vector<8x256xf32>
    %159 = arith.addf %157, %158 : vector<8x256xf32>
    %160 = vector.extract_strided_slice %159 {offsets = [0, 0], sizes = [8, 192], strides = [1, 1]} : vector<8x256xf32> to vector<8x192xf32>
    %cst_49 = arith.constant 5.000000e-01 : f32
    %161 = vector.broadcast %cst_49 : f32 to vector<8x192xf32>
    %162 = arith.mulf %161, %160 : vector<8x192xf32>
    %163 = math.tanh %162 : vector<8x192xf32>
    %cst_50 = arith.constant 5.000000e-01 : f32
    %164 = vector.broadcast %cst_50 : f32 to vector<8x192xf32>
    %165 = arith.mulf %164, %163 : vector<8x192xf32>
    %cst_51 = arith.constant 5.000000e-01 : f32
    %166 = vector.broadcast %cst_51 : f32 to vector<8x192xf32>
    %167 = arith.addf %165, %166 : vector<8x192xf32>
    %168 = vector.extract_strided_slice %159 {offsets = [0, 192], sizes = [8, 64], strides = [1, 1]} : vector<8x256xf32> to vector<8x64xf32>
    %169 = math.tanh %168 : vector<8x64xf32>
    %170 = vector.extract_strided_slice %167 {offsets = [0, 0], sizes = [8, 64], strides = [1, 1]} : vector<8x192xf32> to vector<8x64xf32>
    %171 = vector.extract_strided_slice %167 {offsets = [0, 64], sizes = [8, 64], strides = [1, 1]} : vector<8x192xf32> to vector<8x64xf32>
    %172 = vector.extract_strided_slice %167 {offsets = [0, 128], sizes = [8, 64], strides = [1, 1]} : vector<8x192xf32> to vector<8x64xf32>
    %173 = arith.mulf %171, %151 : vector<8x64xf32>
    %174 = arith.mulf %170, %169 : vector<8x64xf32>
    %175 = arith.addf %173, %174 : vector<8x64xf32>
    %176 = math.tanh %175 : vector<8x64xf32>
    %177 = arith.mulf %172, %176 : vector<8x64xf32>
    %c7_i32 = arith.constant 7 : i32
    %c8_i32_52 = arith.constant 8 : i32
    %178 = arith.muli %c7_i32, %c8_i32_52 : i32
    %179 = tpu.assume_multiple %178, 8 : i32
    %180 = arith.index_cast %179 : i32 to index
    %c0_53 = arith.constant 0 : index
    %181 = vector.load %arg7[%180, %c0_53] : memref<64x256xf32, #tpu.memory_space<vmem>>, vector<8x256xf32>
    %cst_54 = arith.constant dense<0.000000e+00> : vector<8x256xf32>
    %182 = tpu.matmul %177, %7, %cst_54 {dimension_numbers = #tpu.dot_dimension_numbers<[1], [0], [0], [1], [0, 0, 1, 1], [], []>} : vector<8x64xf32>, vector<64x256xf32>, vector<8x256xf32> -> vector<8x256xf32>
    %183 = arith.addf %181, %182 : vector<8x256xf32>
    %184 = vector.extract_strided_slice %183 {offsets = [0, 0], sizes = [8, 192], strides = [1, 1]} : vector<8x256xf32> to vector<8x192xf32>
    %cst_55 = arith.constant 5.000000e-01 : f32
    %185 = vector.broadcast %cst_55 : f32 to vector<8x192xf32>
    %186 = arith.mulf %185, %184 : vector<8x192xf32>
    %187 = math.tanh %186 : vector<8x192xf32>
    %cst_56 = arith.constant 5.000000e-01 : f32
    %188 = vector.broadcast %cst_56 : f32 to vector<8x192xf32>
    %189 = arith.mulf %188, %187 : vector<8x192xf32>
    %cst_57 = arith.constant 5.000000e-01 : f32
    %190 = vector.broadcast %cst_57 : f32 to vector<8x192xf32>
    %191 = arith.addf %189, %190 : vector<8x192xf32>
    %192 = vector.extract_strided_slice %183 {offsets = [0, 192], sizes = [8, 64], strides = [1, 1]} : vector<8x256xf32> to vector<8x64xf32>
    %193 = math.tanh %192 : vector<8x64xf32>
    %194 = vector.extract_strided_slice %191 {offsets = [0, 0], sizes = [8, 64], strides = [1, 1]} : vector<8x192xf32> to vector<8x64xf32>
    %195 = vector.extract_strided_slice %191 {offsets = [0, 64], sizes = [8, 64], strides = [1, 1]} : vector<8x192xf32> to vector<8x64xf32>
    %196 = vector.extract_strided_slice %191 {offsets = [0, 128], sizes = [8, 64], strides = [1, 1]} : vector<8x192xf32> to vector<8x64xf32>
    %197 = arith.mulf %195, %175 : vector<8x64xf32>
    %198 = arith.mulf %194, %193 : vector<8x64xf32>
    %199 = arith.addf %197, %198 : vector<8x64xf32>
    %200 = math.tanh %199 : vector<8x64xf32>
    %201 = arith.mulf %196, %200 : vector<8x64xf32>
    %c8_i32_58 = arith.constant 8 : i32
    %c0_59 = arith.constant 0 : index
    %c0_60 = arith.constant 0 : index
    %202 = vector.load %arg4[%c0_59, %c0_60] : memref<1x64xf32, #tpu.memory_space<vmem>>, vector<1x64xf32>
    %203 = vector.broadcast %202 : vector<1x64xf32> to vector<8x64xf32>
    %204 = arith.mulf %201, %203 : vector<8x64xf32>
    %cst_61 = arith.constant dense<0.000000e+00> : vector<8xf32>
    %205 = vector.multi_reduction <add>, %204, %cst_61 [1] : vector<8x64xf32> to vector<8xf32>
    %206 = vector.shape_cast %205 : vector<8xf32> to vector<8x1xf32>
    %c0_62 = arith.constant 0 : index
    %c0_63 = arith.constant 0 : index
    %207 = vector.load %arg5[%c0_62, %c0_63] : memref<1x1xf32, #tpu.memory_space<vmem>>, vector<1x1xf32>
    %208 = vector.broadcast %207 : vector<1x1xf32> to vector<8x1xf32>
    %209 = arith.addf %206, %208 : vector<8x1xf32>
    %c0_64 = arith.constant 0 : index
    %c0_65 = arith.constant 0 : index
    %210 = vector.load %arg6[%c0_64, %c0_65] : memref<8x1xf32, #tpu.memory_space<vmem>>, vector<8x1xf32>
    tpu.vector_store %arg6[%c0_64, %c0_65], %209 {strides = array<i32>} : memref<8x1xf32, #tpu.memory_space<vmem>>, vector<8x1xf32>,
    return
  }
}

</mosaic_0001>

<llo_original>
// kernel: tpu_custom_call.1
$region0: #{tpu_custom_call.1}
  #allocation0 [shape = 'u32[]', space=smem, size = 0x4, offset = 0x4, fixed_abs, tag = 'smem constant byte address 0x4 - core index']
  #allocation1 [shape = 'u32[72,128]{1,0:T(1,128)}', space=vmem, size = 0x9000, scoped, tag = 'internal scratch']
  #allocation2 [shape = 'f32[64,256]{1,0:T(8,128)}', space=vmem, size = 0x10000, scoped, tag = 'scratch operand']
  #allocation3 [shape = 'f32[1,1]{1,0:T(1,128)S(1)}', space=vmem, size = 0x200, scoped, tag = 'scoped memory for tpu_custom_call.1']
  %s0 = inlined_call_operand.vmem [shape: f32[64,15], index: 0, kind: input, shape index: {}]
  %s1 = inlined_call_operand.vmem [shape: f32[15,256], index: 1, kind: input, shape index: {}]
  %s2 = inlined_call_operand.hbm [shape: f32[64,256], index: 2, kind: input, shape index: {}]
  %s3 = inlined_call_operand.vmem [shape: f32[1,256], index: 3, kind: input, shape index: {}]
  %s4 = inlined_call_operand.vmem [shape: f32[1,64], index: 4, kind: input, shape index: {}]
  %s5 = inlined_call_operand.<no memory space> [shape: f32[1,1], index: 5, kind: input, shape index: {}]
  %s6 = inlined_call_operand.vmem [shape: f32[8,1], index: 6, kind: output, shape index: {}]
  %s7 = sld [smem:[#allocation0]]
  $region38: #{tpu_custom_call.1} parent=0
    _
  %s9 = ssub.s32 1, %s7
  %s10 = scalar_select 0, %s9, %s7
  %v11 = vstv %s5
  %12 = vst [vmem:[#allocation3] sm:$0x1] %v11
  $region1: #{tpu_custom_call.1} parent=0
    #allocation4 [shape = 'u8[65536]{0}', space=vmem, size = 0x10000, scoped, tag = 'input window, operand 2, single buffered']
    #allocation5 [shape = 's32[1]{0}', space=sflag, size = 0x4, scoped, tag = 'scoped memory for tpu_custom_call.1']
    %13 = vsyncpa [#allocation5], 0
    // Predicated region
    $region2: #{tpu_custom_call.1} parent=1 // pred_check
      _
    $region3: #{tpu_custom_call.1} parent=1 // pred_check_branch
      %15 = sbr.rel (0) target = $region5
    $region4: #{tpu_custom_call.1} parent=1 // pred_region
      _
    $region5: #{tpu_custom_call.1} parent=1 // pred_fallthru
      _
    // Predicated region
    $region6: #{tpu_custom_call.1} parent=1 // pred_check
      _
    $region7: #{tpu_custom_call.1} parent=1 // pred_check_branch
      %17 = sbr.rel (0) target = $region9
    $region8: #{tpu_custom_call.1} parent=1 // pred_region
      _
    $region9: #{tpu_custom_call.1} parent=1 // pred_fallthru
      _
    // Predicated region
    $region10: #{tpu_custom_call.1} parent=1 // pred_check
      _
    $region11: #{tpu_custom_call.1} parent=1 // pred_check_branch
      %19 = sbr.rel (0) target = $region13
    $region12: #{tpu_custom_call.1} parent=1 // pred_region
      %21 = vsyncadd [#allocation5], 0
      %s22 = sshll.u32 %s2, 4
      %s23 = int_to_ptr.hbm [resolvable:$true] %s22
      %s24 = sshll.u32 [#allocation4], 4
      %s25 = int_to_ptr.vmem [resolvable:$true] %s24
      %30 = dma.hbm_to_vmem [thread:$0]  %s23, 2048, %s25, [#allocation5], 256, 256, 16
    $region13: #{tpu_custom_call.1} parent=1 // pred_fallthru
      _
    // Predicated region
    $region14: #{tpu_custom_call.1} parent=1 // pred_check
      _
    $region15: #{tpu_custom_call.1} parent=1 // pred_check_branch
      %32 = sbr.rel (0) target = $region17
    $region16: #{tpu_custom_call.1} parent=1 // pred_region
      _
    $region17: #{tpu_custom_call.1} parent=1 // pred_fallthru
      _
    // Predicated region
    $region18: #{tpu_custom_call.1} parent=1 // pred_check
      _
    $region19: #{tpu_custom_call.1} parent=1 // pred_check_branch
      %34 = sbr.rel (0) target = $region21
    $region20: #{tpu_custom_call.1} parent=1 // pred_region
      _
    $region21: #{tpu_custom_call.1} parent=1 // pred_fallthru
      _
    // Predicated region
    $region22: #{tpu_custom_call.1} parent=1 // pred_check
      _
    $region23: #{tpu_custom_call.1} parent=1 // pred_check_branch
      %36 = sbr.rel (0) target = $region25
    $region24: #{tpu_custom_call.1} parent=1 // pred_region
      _
    $region25: #{tpu_custom_call.1} parent=1 // pred_fallthru
      _
    // Predicated region
    $region26: #{tpu_custom_call.1} parent=1 // pred_check
      _
    $region27: #{tpu_custom_call.1} parent=1 // pred_check_branch
      %38 = sbr.rel (0) target = $region29
    $region28: #{tpu_custom_call.1} parent=1 // pred_region
      %40 = dma.done [#allocation5], 2048
    $region29: #{tpu_custom_call.1} parent=1 // pred_fallthru
      _
    %v41 = vld [vmem:[%s0] sm:$0xff]
    %v42 = vld [vmem:[%s0 + $0x8] sm:$0xff]
    %v43 = vld [vmem:[%s0 + $0x10] sm:$0xff]
    %v44 = vld [vmem:[%s0 + $0x18] sm:$0xff]
    %v45 = vld [vmem:[%s0 + $0x20] sm:$0xff]
    %v46 = vld [vmem:[%s0 + $0x28] sm:$0xff]
    %v47 = vld [vmem:[%s0 + $0x30] sm:$0xff]
    %v48 = vld [vmem:[%s0 + $0x38] sm:$0xff]
    %v49 = vld [vmem:[%s1] sm:$0xff]
    %v50 = vld [vmem:[%s1 + $0x8] sm:$0xff]
    %v51 = vld [vmem:[%s1 + $0x10] sm:$0x7f]
    %v52 = vld [vmem:[%s1 + $0x18] sm:$0x7f]
    %v53 = vld [vmem:[%s3] sm:$0x3]
    %v55 = vperm.slane %v53, 0
    %v56 = vperm.slane %v53, 1
    %vm59 = vcmask 121856
    %v61 = vsel %vm59, %v41, 0
    %v64 = vsel %vm59, %v42, 0
    %v67 = vsel %vm59, %v43, 0
    %v70 = vsel %vm59, %v44, 0
    %v73 = vsel %vm59, %v45, 0
    %v76 = vsel %vm59, %v46, 0
    %v79 = vsel %vm59, %v47, 0
    %v82 = vsel %vm59, %v48, 0
    %vm84 = vcmask 1046528
    %v86 = vsel %vm84, %v51, 0
    %v89 = vsel %vm84, %v52, 0
    %91 = vmatpush.msra.mxu0 0.0
    %92 = vmatpush.msra.mxu0 0.0
    %93 = vmatpush.msra.mxu0 0.0
    %94 = vmatpush.msra.mxu0 0.0
    %95 = vmatpush.msra.mxu0 0.0
    %96 = vmatpush.msra.mxu0 0.0
    %97 = vmatpush.msra.mxu0 0.0
    %98 = vmatpush.msra.mxu0 0.0
    %99 = vmatpush.msra.mxu0 0.0
    %100 = vmatpush.msra.mxu0 0.0
    %101 = vmatpush.msra.mxu0 0.0
    %102 = vmatpush.msra.mxu0 0.0
    %103 = vmatpush.msra.mxu0 0.0
    %104 = vmatpush.msra.mxu0 0.0
    %105 = vmatpush.msra.mxu0 %v86
    %106 = vmatpush.msra.mxu0 %v49
    %107 = vmatmul.f32.gmra.mxu0 %v61
    %v108 = vpop.f32.mrf.mxu0
    %v109 = vadd.f32 %v55, %v108
    %110 = vmatmul.f32.gmra.mxu0 %v64
    %v111 = vpop.f32.mrf.mxu0
    %v112 = vadd.f32 %v55, %v111
    %113 = vmatmul.f32.gmra.mxu0 %v67
    %v114 = vpop.f32.mrf.mxu0
    %v115 = vadd.f32 %v55, %v114
    %116 = vmatmul.f32.gmra.mxu0 %v70
    %v117 = vpop.f32.mrf.mxu0
    %v118 = vadd.f32 %v55, %v117
    %119 = vmatmul.f32.gmra.mxu0 %v73
    %v120 = vpop.f32.mrf.mxu0
    %v121 = vadd.f32 %v55, %v120
    %122 = vmatmul.f32.gmra.mxu0 %v76
    %v123 = vpop.f32.mrf.mxu0
    %v124 = vadd.f32 %v55, %v123
    %125 = vmatmul.f32.gmra.mxu0 %v79
    %v126 = vpop.f32.mrf.mxu0
    %v127 = vadd.f32 %v55, %v126
    %128 = vmatmul.f32.gmra.mxu0 %v82
    %v129 = vpop.f32.mrf.mxu0
    %v130 = vadd.f32 %v55, %v129
    %131 = vdwg.mxu0
    %132 = vmatpush.msra.mxu0 0.0
    %133 = vmatpush.msra.mxu0 0.0
    %134 = vmatpush.msra.mxu0 0.0
    %135 = vmatpush.msra.mxu0 0.0
    %136 = vmatpush.msra.mxu0 0.0
    %137 = vmatpush.msra.mxu0 0.0
    %138 = vmatpush.msra.mxu0 0.0
    %139 = vmatpush.msra.mxu0 0.0
    %140 = vmatpush.msra.mxu0 0.0
    %141 = vmatpush.msra.mxu0 0.0
    %142 = vmatpush.msra.mxu0 0.0
    %143 = vmatpush.msra.mxu0 0.0
    %144 = vmatpush.msra.mxu0 0.0
    %145 = vmatpush.msra.mxu0 0.0
    %146 = vmatpush.msra.mxu0 %v89
    %147 = vmatpush.msra.mxu0 %v50
    %148 = vmatmul.f32.gmra.mxu0 %v61
    %v149 = vpop.f32.mrf.mxu0
    %v150 = vadd.f32 %v56, %v149
    %151 = vmatmul.f32.gmra.mxu0 %v64
    %v152 = vpop.f32.mrf.mxu0
    %v153 = vadd.f32 %v56, %v152
    %154 = vmatmul.f32.gmra.mxu0 %v67
    %v155 = vpop.f32.mrf.mxu0
    %v156 = vadd.f32 %v56, %v155
    %157 = vmatmul.f32.gmra.mxu0 %v70
    %v158 = vpop.f32.mrf.mxu0
    %v159 = vadd.f32 %v56, %v158
    %160 = vmatmul.f32.gmra.mxu0 %v73
    %v161 = vpop.f32.mrf.mxu0
    %v162 = vadd.f32 %v56, %v161
    %163 = vmatmul.f32.gmra.mxu0 %v76
    %v164 = vpop.f32.mrf.mxu0
    %v165 = vadd.f32 %v56, %v164
    %166 = vmatmul.f32.gmra.mxu0 %v79
    %v167 = vpop.f32.mrf.mxu0
    %v168 = vadd.f32 %v56, %v167
    %169 = vmatmul.f32.gmra.mxu0 %v82
    %v170 = vpop.f32.mrf.mxu0
    %v171 = vadd.f32 %v56, %v170
    %172 = vdwg.mxu0
    %173 = vst [vmem:[#allocation2] sm:$0xff] %v109
    %174 = vst [vmem:[#allocation2 + $0x8] sm:$0xff] %v150
    %175 = vst [vmem:[#allocation2 + $0x10] sm:$0xff] %v112
    %176 = vst [vmem:[#allocation2 + $0x18] sm:$0xff] %v153
    %177 = vst [vmem:[#allocation2 + $0x20] sm:$0xff] %v115
    %178 = vst [vmem:[#allocation2 + $0x28] sm:$0xff] %v156
    %179 = vst [vmem:[#allocation2 + $0x30] sm:$0xff] %v118
    %180 = vst [vmem:[#allocation2 + $0x38] sm:$0xff] %v159
    %181 = vst [vmem:[#allocation2 + $0x40] sm:$0xff] %v121
    %182 = vst [vmem:[#allocation2 + $0x48] sm:$0xff] %v162
    %183 = vst [vmem:[#allocation2 + $0x50] sm:$0xff] %v124
    %184 = vst [vmem:[#allocation2 + $0x58] sm:$0xff] %v165
    %185 = vst [vmem:[#allocation2 + $0x60] sm:$0xff] %v127
    %186 = vst [vmem:[#allocation2 + $0x68] sm:$0xff] %v168
    %187 = vst [vmem:[#allocation2 + $0x70] sm:$0xff] %v130
    %188 = vst [vmem:[#allocation2 + $0x78] sm:$0xff] %v171
    %v189 = vld [vmem:[#allocation4] sm:$0xff]
    %v190 = vld [vmem:[#allocation4 + $0x8] sm:$0xff]
    %v191 = vld [vmem:[#allocation4 + $0x10] sm:$0xff]
    %v192 = vld [vmem:[#allocation4 + $0x18] sm:$0xff]
    %v193 = vld [vmem:[#allocation4 + $0x20] sm:$0xff]
    %v194 = vld [vmem:[#allocation4 + $0x28] sm:$0xff]
    %v195 = vld [vmem:[#allocation4 + $0x30] sm:$0xff]
    %v196 = vld [vmem:[#allocation4 + $0x38] sm:$0xff]
    %v197 = vld [vmem:[#allocation4 + $0x40] sm:$0xff]
    %v198 = vld [vmem:[#allocation4 + $0x48] sm:$0xff]
    %v199 = vld [vmem:[#allocation4 + $0x50] sm:$0xff]
    %v200 = vld [vmem:[#allocation4 + $0x58] sm:$0xff]
    %v201 = vld [vmem:[#allocation4 + $0x60] sm:$0xff]
    %v202 = vld [vmem:[#allocation4 + $0x68] sm:$0xff]
    %v203 = vld [vmem:[#allocation4 + $0x70] sm:$0xff]
    %v204 = vld [vmem:[#allocation4 + $0x78] sm:$0xff]
    %s205 = smul.u32 0, 2
    %s206 = smul.addr %s205, 8
    %s207 = scalar_lea.vmem [#allocation2], %s206
    %v208 = vld [vmem:[%s207] sm:$0xff]
    %v209 = vld [vmem:[%s207 + $0x8] sm:$0xff]
    %vm210 = vcmask 523264
    %v212 = vsel %vm210, 0.0, 0
    %214 = vmatpush.msra.mxu0 0.0
    %215 = vmatpush.msra.mxu0 0.0
    %216 = vmatpush.msra.mxu0 0.0
    %217 = vmatpush.msra.mxu0 0.0
    %218 = vmatpush.msra.mxu0 0.0
    %219 = vmatpush.msra.mxu0 0.0
    %220 = vmatpush.msra.mxu0 0.0
    %221 = vmatpush.msra.mxu0 0.0
    %222 = vmatpush.msra.mxu0 %v203
    %223 = vmatpush.msra.mxu0 %v201
    %224 = vmatpush.msra.mxu0 %v199
    %225 = vmatpush.msra.mxu0 %v197
    %226 = vmatpush.msra.mxu0 %v195
    %227 = vmatpush.msra.mxu0 %v193
    %228 = vmatpush.msra.mxu0 %v191
    %229 = vmatpush.msra.mxu0 %v189
    %230 = vmatmul.f32.gmra.mxu0 %v212
    %v231 = vpop.f32.mrf.mxu0
    %v232 = vadd.f32 0.0, %v231
    %233 = vdwg.mxu0
    %234 = vmatpush.msra.mxu0 0.0
    %235 = vmatpush.msra.mxu0 0.0
    %236 = vmatpush.msra.mxu0 0.0
    %237 = vmatpush.msra.mxu0 0.0
    %238 = vmatpush.msra.mxu0 0.0
    %239 = vmatpush.msra.mxu0 0.0
    %240 = vmatpush.msra.mxu0 0.0
    %241 = vmatpush.msra.mxu0 0.0
    %242 = vmatpush.msra.mxu0 %v204
    %243 = vmatpush.msra.mxu0 %v202
    %244 = vmatpush.msra.mxu0 %v200
    %245 = vmatpush.msra.mxu0 %v198
    %246 = vmatpush.msra.mxu0 %v196
    %247 = vmatpush.msra.mxu0 %v194
    %248 = vmatpush.msra.mxu0 %v192
    %249 = vmatpush.msra.mxu0 %v190
    %250 = vmatmul.f32.gmra.mxu0 %v212
    %v251 = vpop.f32.mrf.mxu0
    %v252 = vadd.f32 0.0, %v251
    %253 = vdwg.mxu0
    %v254 = vadd.f32 %v208, %v232
    %v255 = vadd.f32 %v209, %v252
    %v256 = vmul.f32 %v254, 0.5
    %v257 = vmul.f32 %v255, 0.5
    %v258 = vtanh.pop %v256
    %v259 = vtanh.pop %v257
    %v260 = vmul.f32 %v258, 0.5
    %v261 = vmul.f32 %v259, 0.5
    %v262 = vadd.f32 %v260, 0.5
    %v263 = vadd.f32 %v261, 0.5
    %v264 = vtanh.pop %v255
    %v265 = vmul.f32 %v262, 0.0
    %267 = vrot.lane.b32.xlu0 %v264, 64
    %v268 = vpop.permute.xlu0 %267
    %v270 = vmul.f32 %v262, %v268
    %272 = vrot.lane.b32.xlu0 %v270, 64
    %v273 = vpop.permute.xlu0 %272
    %v275 = vadd.f32 %v265, %v273
    %v276 = vtanh.pop %v275
    %278 = vrot.lane.b32.xlu0 %v276, 64
    %v279 = vpop.permute.xlu0 %278
    %v281 = vmul.f32 %v263, %v279
    %s282 = smul.u32 1, 2
    %s283 = smul.addr %s282, 8
    %s284 = scalar_lea.vmem [#allocation2], %s283
    %v285 = vld [vmem:[%s284] sm:$0xff]
    %v286 = vld [vmem:[%s284 + $0x8] sm:$0xff]
    %v288 = vsel %vm210, %v281, 0
    %290 = vmatpush.msra.mxu0 0.0
    %291 = vmatpush.msra.mxu0 0.0
    %292 = vmatpush.msra.mxu0 0.0
    %293 = vmatpush.msra.mxu0 0.0
    %294 = vmatpush.msra.mxu0 0.0
    %295 = vmatpush.msra.mxu0 0.0
    %296 = vmatpush.msra.mxu0 0.0
    %297 = vmatpush.msra.mxu0 0.0
    %298 = vmatpush.msra.mxu0 %v203
    %299 = vmatpush.msra.mxu0 %v201
    %300 = vmatpush.msra.mxu0 %v199
    %301 = vmatpush.msra.mxu0 %v197
    %302 = vmatpush.msra.mxu0 %v195
    %303 = vmatpush.msra.mxu0 %v193
    %304 = vmatpush.msra.mxu0 %v191
    %305 = vmatpush.msra.mxu0 %v189
    %306 = vmatmul.f32.gmra.mxu0 %v288
    %v307 = vpop.f32.mrf.mxu0
    %v308 = vadd.f32 0.0, %v307
    %309 = vdwg.mxu0
    %310 = vmatpush.msra.mxu0 0.0
    %311 = vmatpush.msra.mxu0 0.0
    %312 = vmatpush.msra.mxu0 0.0
    %313 = vmatpush.msra.mxu0 0.0
    %314 = vmatpush.msra.mxu0 0.0
    %315 = vmatpush.msra.mxu0 0.0
    %316 = vmatpush.msra.mxu0 0.0
    %317 = vmatpush.msra.mxu0 0.0
    %318 = vmatpush.msra.mxu0 %v204
    %319 = vmatpush.msra.mxu0 %v202
    %320 = vmatpush.msra.mxu0 %v200
    %321 = vmatpush.msra.mxu0 %v198
    %322 = vmatpush.msra.mxu0 %v196
    %323 = vmatpush.msra.mxu0 %v194
    %324 = vmatpush.msra.mxu0 %v192
    %325 = vmatpush.msra.mxu0 %v190
    %326 = vmatmul.f32.gmra.mxu0 %v288
    %v327 = vpop.f32.mrf.mxu0
    %v328 = vadd.f32 0.0, %v327
    %329 = vdwg.mxu0
    %v330 = vadd.f32 %v285, %v308
    %v331 = vadd.f32 %v286, %v328
    %v332 = vmul.f32 %v330, 0.5
    %v333 = vmul.f32 %v331, 0.5
    %v334 = vtanh.pop %v332
    %v335 = vtanh.pop %v333
    %v336 = vmul.f32 %v334, 0.5
    %v337 = vmul.f32 %v335, 0.5
    %v338 = vadd.f32 %v336, 0.5
    %v339 = vadd.f32 %v337, 0.5
    %v340 = vtanh.pop %v331
    %v341 = vmul.f32 %v338, %v275
    %343 = vrot.lane.b32.xlu0 %v340, 64
    %v344 = vpop.permute.xlu0 %343
    %v346 = vmul.f32 %v338, %v344
    %348 = vrot.lane.b32.xlu0 %v346, 64
    %v349 = vpop.permute.xlu0 %348
    %v351 = vadd.f32 %v341, %v349
    %v352 = vtanh.pop %v351
    %354 = vrot.lane.b32.xlu0 %v352, 64
    %v355 = vpop.permute.xlu0 %354
    %v357 = vmul.f32 %v339, %v355
    %s358 = smul.u32 2, 2
    %s359 = smul.addr %s358, 8
    %s360 = scalar_lea.vmem [#allocation2], %s359
    %v361 = vld [vmem:[%s360] sm:$0xff]
    %v362 = vld [vmem:[%s360 + $0x8] sm:$0xff]
    %v364 = vsel %vm210, %v357, 0
    %366 = vmatpush.msra.mxu0 0.0
    %367 = vmatpush.msra.mxu0 0.0
    %368 = vmatpush.msra.mxu0 0.0
    %369 = vmatpush.msra.mxu0 0.0
    %370 = vmatpush.msra.mxu0 0.0
    %371 = vmatpush.msra.mxu0 0.0
    %372 = vmatpush.msra.mxu0 0.0
    %373 = vmatpush.msra.mxu0 0.0
    %374 = vmatpush.msra.mxu0 %v203
    %375 = vmatpush.msra.mxu0 %v201
    %376 = vmatpush.msra.mxu0 %v199
    %377 = vmatpush.msra.mxu0 %v197
    %378 = vmatpush.msra.mxu0 %v195
    %379 = vmatpush.msra.mxu0 %v193
    %380 = vmatpush.msra.mxu0 %v191
    %381 = vmatpush.msra.mxu0 %v189
    %382 = vmatmul.f32.gmra.mxu0 %v364
    %v383 = vpop.f32.mrf.mxu0
    %v384 = vadd.f32 0.0, %v383
    %385 = vdwg.mxu0
    %386 = vmatpush.msra.mxu0 0.0
    %387 = vmatpush.msra.mxu0 0.0
    %388 = vmatpush.msra.mxu0 0.0
    %389 = vmatpush.msra.mxu0 0.0
    %390 = vmatpush.msra.mxu0 0.0
    %391 = vmatpush.msra.mxu0 0.0
    %392 = vmatpush.msra.mxu0 0.0
    %393 = vmatpush.msra.mxu0 0.0
    %394 = vmatpush.msra.mxu0 %v204
    %395 = vmatpush.msra.mxu0 %v202
    %396 = vmatpush.msra.mxu0 %v200
    %397 = vmatpush.msra.mxu0 %v198
    %398 = vmatpush.msra.mxu0 %v196
    %399 = vmatpush.msra.mxu0 %v194
    %400 = vmatpush.msra.mxu0 %v192
    %401 = vmatpush.msra.mxu0 %v190
    %402 = vmatmul.f32.gmra.mxu0 %v364
    %v403 = vpop.f32.mrf.mxu0
    %v404 = vadd.f32 0.0, %v403
    %405 = vdwg.mxu0
    %v406 = vadd.f32 %v361, %v384
    %v407 = vadd.f32 %v362, %v404
    %v408 = vmul.f32 %v406, 0.5
    %v409 = vmul.f32 %v407, 0.5
    %v410 = vtanh.pop %v408
    %v411 = vtanh.pop %v409
    %v412 = vmul.f32 %v410, 0.5
    %v413 = vmul.f32 %v411, 0.5
    %v414 = vadd.f32 %v412, 0.5
    %v415 = vadd.f32 %v413, 0.5
    %v416 = vtanh.pop %v407
    %v417 = vmul.f32 %v414, %v351
    %419 = vrot.lane.b32.xlu0 %v416, 64
    %v420 = vpop.permute.xlu0 %419
    %v422 = vmul.f32 %v414, %v420
    %424 = vrot.lane.b32.xlu0 %v422, 64
    %v425 = vpop.permute.xlu0 %424
    %v427 = vadd.f32 %v417, %v425
    %v428 = vtanh.pop %v427
    %430 = vrot.lane.b32.xlu0 %v428, 64
    %v431 = vpop.permute.xlu0 %430
    %v433 = vmul.f32 %v415, %v431
    %s434 = smul.u32 3, 2
    %s435 = smul.addr %s434, 8
    %s436 = scalar_lea.vmem [#allocation2], %s435
    %v437 = vld [vmem:[%s436] sm:$0xff]
    %v438 = vld [vmem:[%s436 + $0x8] sm:$0xff]
    %v440 = vsel %vm210, %v433, 0
    %442 = vmatpush.msra.mxu0 0.0
    %443 = vmatpush.msra.mxu0 0.0
    %444 = vmatpush.msra.mxu0 0.0
    %445 = vmatpush.msra.mxu0 0.0
    %446 = vmatpush.msra.mxu0 0.0
    %447 = vmatpush.msra.mxu0 0.0
    %448 = vmatpush.msra.mxu0 0.0
    %449 = vmatpush.msra.mxu0 0.0
    %450 = vmatpush.msra.mxu0 %v203
    %451 = vmatpush.msra.mxu0 %v201
    %452 = vmatpush.msra.mxu0 %v199
    %453 = vmatpush.msra.mxu0 %v197
    %454 = vmatpush.msra.mxu0 %v195
    %455 = vmatpush.msra.mxu0 %v193
    %456 = vmatpush.msra.mxu0 %v191
    %457 = vmatpush.msra.mxu0 %v189
    %458 = vmatmul.f32.gmra.mxu0 %v440
    %v459 = vpop.f32.mrf.mxu0
    %v460 = vadd.f32 0.0, %v459
    %461 = vdwg.mxu0
    %462 = vmatpush.msra.mxu0 0.0
    %463 = vmatpush.msra.mxu0 0.0
    %464 = vmatpush.msra.mxu0 0.0
    %465 = vmatpush.msra.mxu0 0.0
    %466 = vmatpush.msra.mxu0 0.0
    %467 = vmatpush.msra.mxu0 0.0
    %468 = vmatpush.msra.mxu0 0.0
    %469 = vmatpush.msra.mxu0 0.0
    %470 = vmatpush.msra.mxu0 %v204
    %471 = vmatpush.msra.mxu0 %v202
    %472 = vmatpush.msra.mxu0 %v200
    %473 = vmatpush.msra.mxu0 %v198
    %474 = vmatpush.msra.mxu0 %v196
    %475 = vmatpush.msra.mxu0 %v194
    %476 = vmatpush.msra.mxu0 %v192
    %477 = vmatpush.msra.mxu0 %v190
    %478 = vmatmul.f32.gmra.mxu0 %v440
    %v479 = vpop.f32.mrf.mxu0
    %v480 = vadd.f32 0.0, %v479
    %481 = vdwg.mxu0
    %v482 = vadd.f32 %v437, %v460
    %v483 = vadd.f32 %v438, %v480
    %v484 = vmul.f32 %v482, 0.5
    %v485 = vmul.f32 %v483, 0.5
    %v486 = vtanh.pop %v484
    %v487 = vtanh.pop %v485
    %v488 = vmul.f32 %v486, 0.5
    %v489 = vmul.f32 %v487, 0.5
    %v490 = vadd.f32 %v488, 0.5
    %v491 = vadd.f32 %v489, 0.5
    %v492 = vtanh.pop %v483
    %v493 = vmul.f32 %v490, %v427
    %495 = vrot.lane.b32.xlu0 %v492, 64
    %v496 = vpop.permute.xlu0 %495
    %v498 = vmul.f32 %v490, %v496
    %500 = vrot.lane.b32.xlu0 %v498, 64
    %v501 = vpop.permute.xlu0 %500
    %v503 = vadd.f32 %v493, %v501
    %v504 = vtanh.pop %v503
    %506 = vrot.lane.b32.xlu0 %v504, 64
    %v507 = vpop.permute.xlu0 %506
    %v509 = vmul.f32 %v491, %v507
    %s510 = smul.u32 4, 2
    %s511 = smul.addr %s510, 8
    %s512 = scalar_lea.vmem [#allocation2], %s511
    %v513 = vld [vmem:[%s512] sm:$0xff]
    %v514 = vld [vmem:[%s512 + $0x8] sm:$0xff]
    %v516 = vsel %vm210, %v509, 0
    %518 = vmatpush.msra.mxu0 0.0
    %519 = vmatpush.msra.mxu0 0.0
    %520 = vmatpush.msra.mxu0 0.0
    %521 = vmatpush.msra.mxu0 0.0
    %522 = vmatpush.msra.mxu0 0.0
    %523 = vmatpush.msra.mxu0 0.0
    %524 = vmatpush.msra.mxu0 0.0
    %525 = vmatpush.msra.mxu0 0.0
    %526 = vmatpush.msra.mxu0 %v203
    %527 = vmatpush.msra.mxu0 %v201
    %528 = vmatpush.msra.mxu0 %v199
    %529 = vmatpush.msra.mxu0 %v197
    %530 = vmatpush.msra.mxu0 %v195
    %531 = vmatpush.msra.mxu0 %v193
    %532 = vmatpush.msra.mxu0 %v191
    %533 = vmatpush.msra.mxu0 %v189
    %534 = vmatmul.f32.gmra.mxu0 %v516
    %v535 = vpop.f32.mrf.mxu0
    %v536 = vadd.f32 0.0, %v535
    %537 = vdwg.mxu0
    %538 = vmatpush.msra.mxu0 0.0
    %539 = vmatpush.msra.mxu0 0.0
    %540 = vmatpush.msra.mxu0 0.0
    %541 = vmatpush.msra.mxu0 0.0
    %542 = vmatpush.msra.mxu0 0.0
    %543 = vmatpush.msra.mxu0 0.0
    %544 = vmatpush.msra.mxu0 0.0
    %545 = vmatpush.msra.mxu0 0.0
    %546 = vmatpush.msra.mxu0 %v204
    %547 = vmatpush.msra.mxu0 %v202
    %548 = vmatpush.msra.mxu0 %v200
    %549 = vmatpush.msra.mxu0 %v198
    %550 = vmatpush.msra.mxu0 %v196
    %551 = vmatpush.msra.mxu0 %v194
    %552 = vmatpush.msra.mxu0 %v192
    %553 = vmatpush.msra.mxu0 %v190
    %554 = vmatmul.f32.gmra.mxu0 %v516
    %v555 = vpop.f32.mrf.mxu0
    %v556 = vadd.f32 0.0, %v555
    %557 = vdwg.mxu0
    %v558 = vadd.f32 %v513, %v536
    %v559 = vadd.f32 %v514, %v556
    %v560 = vmul.f32 %v558, 0.5
    %v561 = vmul.f32 %v559, 0.5
    %v562 = vtanh.pop %v560
    %v563 = vtanh.pop %v561
    %v564 = vmul.f32 %v562, 0.5
    %v565 = vmul.f32 %v563, 0.5
    %v566 = vadd.f32 %v564, 0.5
    %v567 = vadd.f32 %v565, 0.5
    %v568 = vtanh.pop %v559
    %v569 = vmul.f32 %v566, %v503
    %571 = vrot.lane.b32.xlu0 %v568, 64
    %v572 = vpop.permute.xlu0 %571
    %v574 = vmul.f32 %v566, %v572
    %576 = vrot.lane.b32.xlu0 %v574, 64
    %v577 = vpop.permute.xlu0 %576
    %v579 = vadd.f32 %v569, %v577
    %v580 = vtanh.pop %v579
    %582 = vrot.lane.b32.xlu0 %v580, 64
    %v583 = vpop.permute.xlu0 %582
    %v585 = vmul.f32 %v567, %v583
    %s586 = smul.u32 5, 2
    %s587 = smul.addr %s586, 8
    %s588 = scalar_lea.vmem [#allocation2], %s587
    %v589 = vld [vmem:[%s588] sm:$0xff]
    %v590 = vld [vmem:[%s588 + $0x8] sm:$0xff]
    %v592 = vsel %vm210, %v585, 0
    %594 = vmatpush.msra.mxu0 0.0
    %595 = vmatpush.msra.mxu0 0.0
    %596 = vmatpush.msra.mxu0 0.0
    %597 = vmatpush.msra.mxu0 0.0
    %598 = vmatpush.msra.mxu0 0.0
    %599 = vmatpush.msra.mxu0 0.0
    %600 = vmatpush.msra.mxu0 0.0
    %601 = vmatpush.msra.mxu0 0.0
    %602 = vmatpush.msra.mxu0 %v203
    %603 = vmatpush.msra.mxu0 %v201
    %604 = vmatpush.msra.mxu0 %v199
    %605 = vmatpush.msra.mxu0 %v197
    %606 = vmatpush.msra.mxu0 %v195
    %607 = vmatpush.msra.mxu0 %v193
    %608 = vmatpush.msra.mxu0 %v191
    %609 = vmatpush.msra.mxu0 %v189
    %610 = vmatmul.f32.gmra.mxu0 %v592
    %v611 = vpop.f32.mrf.mxu0
    %v612 = vadd.f32 0.0, %v611
    %613 = vdwg.mxu0
    %614 = vmatpush.msra.mxu0 0.0
    %615 = vmatpush.msra.mxu0 0.0
    %616 = vmatpush.msra.mxu0 0.0
    %617 = vmatpush.msra.mxu0 0.0
    %618 = vmatpush.msra.mxu0 0.0
    %619 = vmatpush.msra.mxu0 0.0
    %620 = vmatpush.msra.mxu0 0.0
    %621 = vmatpush.msra.mxu0 0.0
    %622 = vmatpush.msra.mxu0 %v204
    %623 = vmatpush.msra.mxu0 %v202
    %624 = vmatpush.msra.mxu0 %v200
    %625 = vmatpush.msra.mxu0 %v198
    %626 = vmatpush.msra.mxu0 %v196
    %627 = vmatpush.msra.mxu0 %v194
    %628 = vmatpush.msra.mxu0 %v192
    %629 = vmatpush.msra.mxu0 %v190
    %630 = vmatmul.f32.gmra.mxu0 %v592
    %v631 = vpop.f32.mrf.mxu0
    %v632 = vadd.f32 0.0, %v631
    %633 = vdwg.mxu0
    %v634 = vadd.f32 %v589, %v612
    %v635 = vadd.f32 %v590, %v632
    %v636 = vmul.f32 %v634, 0.5
    %v637 = vmul.f32 %v635, 0.5
    %v638 = vtanh.pop %v636
    %v639 = vtanh.pop %v637
    %v640 = vmul.f32 %v638, 0.5
    %v641 = vmul.f32 %v639, 0.5
    %v642 = vadd.f32 %v640, 0.5
    %v643 = vadd.f32 %v641, 0.5
    %v644 = vtanh.pop %v635
    %v645 = vmul.f32 %v642, %v579
    %647 = vrot.lane.b32.xlu0 %v644, 64
    %v648 = vpop.permute.xlu0 %647
    %v650 = vmul.f32 %v642, %v648
    %652 = vrot.lane.b32.xlu0 %v650, 64
    %v653 = vpop.permute.xlu0 %652
    %v655 = vadd.f32 %v645, %v653
    %v656 = vtanh.pop %v655
    %658 = vrot.lane.b32.xlu0 %v656, 64
    %v659 = vpop.permute.xlu0 %658
    %v661 = vmul.f32 %v643, %v659
    %s662 = smul.u32 6, 2
    %s663 = smul.addr %s662, 8
    %s664 = scalar_lea.vmem [#allocation2], %s663
    %v665 = vld [vmem:[%s664] sm:$0xff]
    %v666 = vld [vmem:[%s664 + $0x8] sm:$0xff]
    %v668 = vsel %vm210, %v661, 0
    %670 = vmatpush.msra.mxu0 0.0
    %671 = vmatpush.msra.mxu0 0.0
    %672 = vmatpush.msra.mxu0 0.0
    %673 = vmatpush.msra.mxu0 0.0
    %674 = vmatpush.msra.mxu0 0.0
    %675 = vmatpush.msra.mxu0 0.0
    %676 = vmatpush.msra.mxu0 0.0
    %677 = vmatpush.msra.mxu0 0.0
    %678 = vmatpush.msra.mxu0 %v203
    %679 = vmatpush.msra.mxu0 %v201
    %680 = vmatpush.msra.mxu0 %v199
    %681 = vmatpush.msra.mxu0 %v197
    %682 = vmatpush.msra.mxu0 %v195
    %683 = vmatpush.msra.mxu0 %v193
    %684 = vmatpush.msra.mxu0 %v191
    %685 = vmatpush.msra.mxu0 %v189
    %686 = vmatmul.f32.gmra.mxu0 %v668
    %v687 = vpop.f32.mrf.mxu0
    %v688 = vadd.f32 0.0, %v687
    %689 = vdwg.mxu0
    %690 = vmatpush.msra.mxu0 0.0
    %691 = vmatpush.msra.mxu0 0.0
    %692 = vmatpush.msra.mxu0 0.0
    %693 = vmatpush.msra.mxu0 0.0
    %694 = vmatpush.msra.mxu0 0.0
    %695 = vmatpush.msra.mxu0 0.0
    %696 = vmatpush.msra.mxu0 0.0
    %697 = vmatpush.msra.mxu0 0.0
    %698 = vmatpush.msra.mxu0 %v204
    %699 = vmatpush.msra.mxu0 %v202
    %700 = vmatpush.msra.mxu0 %v200
    %701 = vmatpush.msra.mxu0 %v198
    %702 = vmatpush.msra.mxu0 %v196
    %703 = vmatpush.msra.mxu0 %v194
    %704 = vmatpush.msra.mxu0 %v192
    %705 = vmatpush.msra.mxu0 %v190
    %706 = vmatmul.f32.gmra.mxu0 %v668
    %v707 = vpop.f32.mrf.mxu0
    %v708 = vadd.f32 0.0, %v707
    %709 = vdwg.mxu0
    %v710 = vadd.f32 %v665, %v688
    %v711 = vadd.f32 %v666, %v708
    %v712 = vmul.f32 %v710, 0.5
    %v713 = vmul.f32 %v711, 0.5
    %v714 = vtanh.pop %v712
    %v715 = vtanh.pop %v713
    %v716 = vmul.f32 %v714, 0.5
    %v717 = vmul.f32 %v715, 0.5
    %v718 = vadd.f32 %v716, 0.5
    %v719 = vadd.f32 %v717, 0.5
    %v720 = vtanh.pop %v711
    %v721 = vmul.f32 %v718, %v655
    %723 = vrot.lane.b32.xlu0 %v720, 64
    %v724 = vpop.permute.xlu0 %723
    %v726 = vmul.f32 %v718, %v724
    %728 = vrot.lane.b32.xlu0 %v726, 64
    %v729 = vpop.permute.xlu0 %728
    %v731 = vadd.f32 %v721, %v729
    %v732 = vtanh.pop %v731
    %734 = vrot.lane.b32.xlu0 %v732, 64
    %v735 = vpop.permute.xlu0 %734
    %v737 = vmul.f32 %v719, %v735
    %s738 = smul.u32 7, 2
    %s739 = smul.addr %s738, 8
    %s740 = scalar_lea.vmem [#allocation2], %s739
    %v741 = vld [vmem:[%s740] sm:$0xff]
    %v742 = vld [vmem:[%s740 + $0x8] sm:$0xff]
    %v744 = vsel %vm210, %v737, 0
    %746 = vmatpush.msra.mxu0 0.0
    %747 = vmatpush.msra.mxu0 0.0
    %748 = vmatpush.msra.mxu0 0.0
    %749 = vmatpush.msra.mxu0 0.0
    %750 = vmatpush.msra.mxu0 0.0
    %751 = vmatpush.msra.mxu0 0.0
    %752 = vmatpush.msra.mxu0 0.0
    %753 = vmatpush.msra.mxu0 0.0
    %754 = vmatpush.msra.mxu0 %v203
    %755 = vmatpush.msra.mxu0 %v201
    %756 = vmatpush.msra.mxu0 %v199
    %757 = vmatpush.msra.mxu0 %v197
    %758 = vmatpush.msra.mxu0 %v195
    %759 = vmatpush.msra.mxu0 %v193
    %760 = vmatpush.msra.mxu0 %v191
    %761 = vmatpush.msra.mxu0 %v189
    %762 = vmatmul.f32.gmra.mxu0 %v744
    %v763 = vpop.f32.mrf.mxu0
    %v764 = vadd.f32 0.0, %v763
    %765 = vdwg.mxu0
    %766 = vmatpush.msra.mxu0 0.0
    %767 = vmatpush.msra.mxu0 0.0
    %768 = vmatpush.msra.mxu0 0.0
    %769 = vmatpush.msra.mxu0 0.0
    %770 = vmatpush.msra.mxu0 0.0
    %771 = vmatpush.msra.mxu0 0.0
    %772 = vmatpush.msra.mxu0 0.0
    %773 = vmatpush.msra.mxu0 0.0
    %774 = vmatpush.msra.mxu0 %v204
    %775 = vmatpush.msra.mxu0 %v202
    %776 = vmatpush.msra.mxu0 %v200
    %777 = vmatpush.msra.mxu0 %v198
    %778 = vmatpush.msra.mxu0 %v196
    %779 = vmatpush.msra.mxu0 %v194
    %780 = vmatpush.msra.mxu0 %v192
    %781 = vmatpush.msra.mxu0 %v190
    %782 = vmatmul.f32.gmra.mxu0 %v744
    %v783 = vpop.f32.mrf.mxu0
    %v784 = vadd.f32 0.0, %v783
    %785 = vdwg.mxu0
    %v786 = vadd.f32 %v741, %v764
    %v787 = vadd.f32 %v742, %v784
    %v788 = vmul.f32 %v786, 0.5
    %v789 = vmul.f32 %v787, 0.5
    %v790 = vtanh.pop %v788
    %v791 = vtanh.pop %v789
    %v792 = vmul.f32 %v790, 0.5
    %v793 = vmul.f32 %v791, 0.5
    %v794 = vadd.f32 %v792, 0.5
    %v795 = vadd.f32 %v793, 0.5
    %v796 = vtanh.pop %v787
    %v797 = vmul.f32 %v794, %v731
    %799 = vrot.lane.b32.xlu0 %v796, 64
    %v800 = vpop.permute.xlu0 %799
    %v802 = vmul.f32 %v794, %v800
    %804 = vrot.lane.b32.xlu0 %v802, 64
    %v805 = vpop.permute.xlu0 %804
    %v807 = vadd.f32 %v797, %v805
    %v808 = vtanh.pop %v807
    %810 = vrot.lane.b32.xlu0 %v808, 64
    %v811 = vpop.permute.xlu0 %810
    %v813 = vmul.f32 %v795, %v811
    %v814 = vld [vmem:[%s4] sm:$0x1]
    %v816 = vperm.slane %v814, 0
    %v818 = vmul.f32 %v813, %v816
    %v819 = vsel %vm210, %v818, 0.0
    %820 = vadd.xlane.f32.xlu0 %v819
    %v821 = vpop.xlane.xlu0 %820
    %v822 = vld [vmem:[#allocation3] sm:$0x1]
    %v824 = vperm.slane %v822, 0
    %v826 = vadd.f32 %v821, %v824
    %vm827 = vcmask 7168
    %828 = vst.msk [vmem:[%s6] sm:$0xff] %vm827, %v826
    // Predicated region
    $region30: #{tpu_custom_call.1} parent=1 // pred_check
      _
    $region31: #{tpu_custom_call.1} parent=1 // pred_check_branch
      %830 = sbr.rel (0) target = $region33
    $region32: #{tpu_custom_call.1} parent=1 // pred_region
      _
    $region33: #{tpu_custom_call.1} parent=1 // pred_fallthru
      _
    // Predicated region
    $region34: #{tpu_custom_call.1} parent=1 // pred_check
      _
    $region35: #{tpu_custom_call.1} parent=1 // pred_check_branch
      %832 = sbr.rel (0) target = $region37
    $region36: #{tpu_custom_call.1} parent=1 // pred_region
      _
    $region37: #{tpu_custom_call.1} parent=1 // pred_fallthru
      _
    %833 = vsyncpa [#allocation5], 1

</llo_original>
